<compile_context>
chip_gen: v6e
topology: v6e:2x2x1
jax: 0.10.0
libtpu: 0.0.40
codegen_flags: <defaults>
</compile_context>

<pallas_src>
import functools

import jax
import jax.numpy as jnp
from jax.experimental import pallas as pl
from jax.experimental.pallas import tpu as pltpu

LANE = 128              # lane-dense padded width for features / hidden / classes
SMALL_MAX_NODES = 1024  # <= this -> single-block fused kernel (no grid)
TM = 256                # row tile (>= 2 row tiles -> both v7x TensorCores get work)
TK = 512                # A contraction tile (reduction axis, streamed)


def _round_up(x, m):
    return (x + m - 1) // m * m


def _pad2d(x, rows, cols, dtype=None):
    r, c = x.shape
    out = jnp.pad(x, ((0, rows - r), (0, cols - c)))
    return out if dtype is None else out.astype(dtype)


# ---------------------------------------------------------------------------
# Small-graph path: one fused, non-gridded kernel (everything VMEM-resident)
# ---------------------------------------------------------------------------
def _gcn_small_kernel(a_ref, x_ref, w1_ref, b1_ref, w2_ref, b2_ref,
                      w3_ref, b3_ref, wc_ref, bc_ref, h_out_ref, logits_ref):
    a = a_ref[...]                      # bf16 normalized adjacency

    def layer(h_bf16, w_ref, b_ref):
        xw = jnp.dot(h_bf16, w_ref[...], preferred_element_type=jnp.float32)
        z = jnp.dot(a, xw.astype(jnp.bfloat16), preferred_element_type=jnp.float32)
        return jnp.tanh(z + b_ref[...])          # f32 bias + tanh (VPU/EUP)

    h1 = layer(x_ref[...], w1_ref, b1_ref)
    h2 = layer(h1.astype(jnp.bfloat16), w2_ref, b2_ref)
    h3 = layer(h2.astype(jnp.bfloat16), w3_ref, b3_ref)
    h_out_ref[...] = h3
    logits_ref[...] = (jnp.dot(h3.astype(jnp.bfloat16), wc_ref[...],
                               preferred_element_type=jnp.float32) + bc_ref[...])


def _small_call(a_pad, x_pad, w1, b1, w2, b2, w3, b3, wc, bc):
    n_pad = a_pad.shape[0]
    return pl.pallas_call(
        _gcn_small_kernel,
        out_shape=(jax.ShapeDtypeStruct((n_pad, LANE), jnp.float32),   # h3
                   jax.ShapeDtypeStruct((n_pad, LANE), jnp.float32)),  # logits
    )(a_pad, x_pad, w1, b1, w2, b2, w3, b3, wc, bc)


# ---------------------------------------------------------------------------
# Large-graph path: hoisted XW kernel + tiled A-streaming conv kernel
# ---------------------------------------------------------------------------
def _xw_kernel(h_ref, w_ref, xw_ref):
    # XW computed once per layer (not per row tile), emitted bf16 for the MXU.
    xw_ref[...] = jnp.dot(h_ref[...], w_ref[...],
                          preferred_element_type=jnp.float32).astype(jnp.bfloat16)


def _xw_call(h_pad, w_pad):
    n_pad = h_pad.shape[0]
    return pl.pallas_call(
        _xw_kernel,
        out_shape=jax.ShapeDtypeStruct((n_pad, LANE), jnp.bfloat16),
        grid=(n_pad // TM,),
        in_specs=[pl.BlockSpec((TM, LANE), lambda i: (i, 0)),
                  pl.BlockSpec((LANE, LANE), lambda i: (0, 0))],
        out_specs=pl.BlockSpec((TM, LANE), lambda i: (i, 0)),
        compiler_params=pltpu.CompilerParams(dimension_semantics=("parallel",)),
    )(h_pad, w_pad)


def _accumulate(a_ref, xw_ref, acc_ref, *, tk, xw_resident):
    """acc[i] += A[i, k] @ XW[k] for the current (i, k) grid step."""
    k = pl.program_id(1)

    @pl.when(k == 0)
    def _():
        acc_ref[...] = jnp.zeros_like(acc_ref)

    if xw_resident:
        start = pl.multiple_of(k * tk, tk)
        xw_k = xw_ref[pl.ds(start, tk), :]      # slice of the VMEM-resident XW
    else:
        xw_k = xw_ref[...]                      # streamed (tk, 128) slice
    acc_ref[...] += jnp.dot(a_ref[...], xw_k, preferred_element_type=jnp.float32)


def _gcn_conv_kernel(a_ref, xw_ref, b_ref, out_ref, acc_ref, *, tk, xw_resident):
    _accumulate(a_ref, xw_ref, acc_ref, tk=tk, xw_resident=xw_resident)

    @pl.when(pl.program_id(1) == pl.num_programs(1) - 1)
    def _():
        # f32 bias + tanh, store in out dtype (bf16 for intermediate layers).
        out_ref[...] = jnp.tanh(acc_ref[...] + b_ref[...]).astype(out_ref.dtype)


def _gcn_conv_classifier_kernel(a_ref, xw_ref, b_ref, wc_ref, bc_ref,
                                h_out_ref, logits_ref, acc_ref, *, tk, xw_resident):
    _accumulate(a_ref, xw_ref, acc_ref, tk=tk, xw_resident=xw_resident)

    @pl.when(pl.program_id(1) == pl.num_programs(1) - 1)
    def _():
        h3 = jnp.tanh(acc_ref[...] + b_ref[...])
        h_out_ref[...] = h3
        logits_ref[...] = (jnp.dot(h3.astype(jnp.bfloat16), wc_ref[...],
                                   preferred_element_type=jnp.float32)
                           + bc_ref[...])


def _make_a_spec(tm, tk):
    index_map = lambda i, k: (i, k)
    try:
        # Kernel is HBM-bound on A: a third buffer hides DMA issue/completion
        # jitter behind the short per-step compute.
        return pl.BlockSpec((tm, tk), index_map, pipeline_mode=pl.Buffered(3))
    except (TypeError, AttributeError):
        return pl.BlockSpec((tm, tk), index_map)   # default double-buffering


def _conv_call(a_pad, xw_pad, b_pad, *, out_dtype=jnp.bfloat16,
               classifier=False, wc_pad=None, bc_pad=None):
    n_pad = a_pad.shape[0]
    tm, tk = TM, TK
    grid = (n_pad // tm, n_pad // tk)

    # Hold XW resident in VMEM when it fits (per v7x 64 MiB guidance), else
    # stream it in (tk, 128) bf16 slices.
    xw_resident = (n_pad * LANE * 2) <= (24 << 20)

    a_spec = _make_a_spec(tm, tk)
    if xw_resident:
        xw_spec = pl.BlockSpec((n_pad, LANE), lambda i, k: (0, 0))   # DMA'd once
    else:
        xw_spec = pl.BlockSpec((tk, LANE), lambda i, k: (k, 0))
    b_spec = pl.BlockSpec((1, LANE), lambda i, k: (0, 0))
    wc_spec = pl.BlockSpec((LANE, LANE), lambda i, k: (0, 0))
    out_spec = pl.BlockSpec((tm, LANE), lambda i, k: (i, 0))         # lane-dense

    vmem_bytes = (3 * tm * tk * 2                                         # A bufs
                  + (2 * n_pad * LANE * 2 if xw_resident else 3 * tk * LANE * 2)
                  + 2 * tm * LANE * 4 * (2 if classifier else 1)          # outputs
                  + tm * LANE * 4                                         # acc
                  + (8 << 20))                                            # headroom
    compiler_params = pltpu.CompilerParams(
        dimension_semantics=("parallel", "arbitrary"),   # rows -> megacore split
        vmem_limit_bytes=int(min(max(vmem_bytes, 32 << 20), 64 << 20)),
    )
    scratch = [pltpu.VMEM((tm, LANE), jnp.float32)]

    if classifier:
        kernel = functools.partial(_gcn_conv_classifier_kernel,
                                   tk=tk, xw_resident=xw_resident)
        return pl.pallas_call(
            kernel,
            out_shape=(jax.ShapeDtypeStruct((n_pad, LANE), jnp.float32),   # h3
                       jax.ShapeDtypeStruct((n_pad, LANE), jnp.float32)),  # logits
            grid=grid,
            in_specs=[a_spec, xw_spec, b_spec, wc_spec, b_spec],
            out_specs=(out_spec, out_spec),
            scratch_shapes=scratch,
            compiler_params=compiler_params,
        )(a_pad, xw_pad, b_pad, wc_pad, bc_pad)

    kernel = functools.partial(_gcn_conv_kernel, tk=tk, xw_resident=xw_resident)
    return pl.pallas_call(
        kernel,
        out_shape=jax.ShapeDtypeStruct((n_pad, LANE), out_dtype),
        grid=grid,
        in_specs=[a_spec, xw_spec, b_spec],
        out_specs=out_spec,
        scratch_shapes=scratch,
        compiler_params=compiler_params,
    )(a_pad, xw_pad, b_pad)


# ---------------------------------------------------------------------------
# Forward pass
# ---------------------------------------------------------------------------
@jax.jit
def gcn_forward(a_norm, x, params):
    n = x.shape[0]
    num_classes = params["wc"].shape[1]

    small = n <= SMALL_MAX_NODES
    # Pad rows only as far as needed (128 for tiny graphs, tile multiple for big).
    n_pad = _round_up(max(n, 8), LANE) if small else _round_up(n, max(TM, TK))

    # A in bf16 (dominant HBM stream), features in bf16 (only ever an MXU input),
    # weights bf16, biases f32 (bias-add/tanh happen in f32).
    a_pad = _pad2d(a_norm, n_pad, n_pad, jnp.bfloat16)
    x_pad = _pad2d(x, n_pad, LANE, jnp.bfloat16)
    w1 = _pad2d(params["w1"], LANE, LANE, jnp.bfloat16)
    w2 = _pad2d(params["w2"], LANE, LANE, jnp.bfloat16)
    w3 = _pad2d(params["w3"], LANE, LANE, jnp.bfloat16)
    wc = _pad2d(params["wc"], LANE, LANE, jnp.bfloat16)
    b1 = _pad2d(params["b1"], 1, LANE)
    b2 = _pad2d(params["b2"], 1, LANE)
    b3 = _pad2d(params["b3"], 1, LANE)
    bc = _pad2d(params["bc"], 1, LANE)

    if small:
        h3_pad, logits_pad = _small_call(a_pad, x_pad, w1, b1, w2, b2, w3, b3, wc, bc)
    else:
        # Per layer: hoisted XW (once), then A streamed over (row, k) tiles.
        xw1 = _xw_call(x_pad, w1)
        h1 = _conv_call(a_pad, xw1, b1, out_dtype=jnp.bfloat16)
        xw2 = _xw_call(h1, w2)
        h2 = _conv_call(a_pad, xw2, b2, out_dtype=jnp.bfloat16)
        xw3 = _xw_call(h2, w3)
        h3_pad, logits_pad = _conv_call(a_pad, xw3, b3, classifier=True,
                                        wc_pad=wc, bc_pad=bc)

    return logits_pad[:n, :num_classes], h3_pad[:n, :2]


# ---------------------------------------------------------------------------
# Glue: dense normalized adjacency, params, reference
# ---------------------------------------------------------------------------
def build_normalized_adjacency(edge_index, num_nodes):
    """Dense D^-1/2 (A + I) D^-1/2, matching torch_geometric GCNConv defaults."""
    src, dst = edge_index
    a = jnp.zeros((num_nodes, num_nodes), dtype=jnp.float32)
    a = a.at[src, dst].set(1.0)
    a = a.at[dst, src].set(1.0)                                  # undirected
    a = jnp.maximum(a, jnp.eye(num_nodes, dtype=jnp.float32))    # self loops
    deg = a.sum(axis=1)
    d_inv_sqrt = jnp.where(deg > 0, deg ** -0.5, 0.0)
    return d_inv_sqrt[:, None] * a * d_inv_sqrt[None, :]


def init_params(key, num_features, num_classes):
    """Deterministic synthetic parameters (shapes match the PyTorch module)."""
    ks = jax.random.split(key, 8)

    def glorot(k, fan_in, fan_out):
        lim = (6.0 / (fan_in + fan_out)) ** 0.5
        return jax.random.uniform(k, (fan_in, fan_out), jnp.float32, -lim, lim)

    return {
        "w1": glorot(ks[0], num_features, 4), "b1": jnp.zeros((1, 4), jnp.float32),
        "w2": glorot(ks[1], 4, 4),            "b2": jnp.zeros((1, 4), jnp.float32),
        "w3": glorot(ks[2], 4, 2),            "b3": jnp.zeros((1, 2), jnp.float32),
        "wc": glorot(ks[3], 2, num_classes),
        "bc": jax.random.uniform(ks[4], (1, num_classes), jnp.float32, -0.5, 0.5),
    }


def gcn_reference(a, x, params):
    h = jnp.tanh(a @ (x @ params["w1"]) + params["b1"])
    h = jnp.tanh(a @ (h @ params["w2"]) + params["b2"])
    h = jnp.tanh(a @ (h @ params["w3"]) + params["b3"])
    out = h @ params["wc"] + params["bc"]
    return out, h


if __name__ == "__main__":
    key = jax.random.PRNGKey(0)
    k_x, k_p, k_e = jax.random.split(key, 3)

    num_nodes, num_features, num_classes = 8, 8, 4

    # --- Tiny graph (matches the PyTorch demo): single-block fused kernel path.
    x = jax.random.normal(k_x, (num_nodes, num_features), dtype=jnp.float32)
    edge_index = jnp.array(
        [[0, 1, 2, 3, 4, 5, 6, 0, 2],
         [1, 2, 3, 4, 5, 6, 7, 7, 5]], dtype=jnp.int32)
    a_norm = build_normalized_adjacency(edge_index, num_nodes)
    params = init_params(k_p, num_features, num_classes)

    out, h = gcn_forward(a_norm, x, params)
    jax.block_until_ready((out, h))
    assert out.shape == (num_nodes, num_classes)
    assert h.shape == (num_nodes, 2)

    out_ref, h_ref = gcn_reference(a_norm, x, params)
    assert jnp.allclose(out, out_ref, atol=5e-2, rtol=5e-2), "logits mismatch (small)"
    assert jnp.allclose(h, h_ref, atol=5e-2, rtol=5e-2), "embedding mismatch (small)"

    # --- Larger random graph: exercises the tiled streamed-A / resident-XW path.
    n_big = 1300
    k_e1, k_e2, k_xb = jax.random.split(k_e, 3)
    n_edges = 4 * n_big
    src = jax.random.randint(k_e1, (n_edges,), 0, n_big, dtype=jnp.int32)
    dst = jax.random.randint(k_e2, (n_edges,), 0, n_big, dtype=jnp.int32)
    a_big = build_normalized_adjacency(jnp.stack([src, dst]), n_big)
    x_big = jax.random.normal(k_xb, (n_big, num_features), dtype=jnp.float32)

    out_b, h_b = gcn_forward(a_big, x_big, params)
    jax.block_until_ready((out_b, h_b))
    out_bref, h_bref = gcn_reference(a_big, x_big, params)
    assert jnp.allclose(out_b, out_bref, atol=5e-2, rtol=5e-2), "logits mismatch (tiled)"
    assert jnp.allclose(h_b, h_bref, atol=5e-2, rtol=5e-2), "embedding mismatch (tiled)"

    print("KERNEL_OK")
</pallas_src>

<mosaic_0001>
module attributes {stable_mosaic.version = 11 : i64} {
  func.func @_gcn_small_kernel(%arg0: memref<128x128xbf16, #tpu.memory_space<vmem>>, %arg1: memref<128x128xbf16, #tpu.memory_space<vmem>>, %arg2: memref<128x128xbf16, #tpu.memory_space<vmem>>, %arg3: memref<1x128xf32, #tpu.memory_space<vmem>>, %arg4: memref<128x128xbf16, #tpu.memory_space<vmem>>, %arg5: memref<1x128xf32, #tpu.memory_space<vmem>>, %arg6: memref<128x128xbf16, #tpu.memory_space<vmem>>, %arg7: memref<1x128xf32, #tpu.memory_space<vmem>>, %arg8: memref<128x128xbf16, #tpu.memory_space<vmem>>, %arg9: memref<1x128xf32, #tpu.memory_space<vmem>>, %arg10: memref<128x128xf32, #tpu.memory_space<vmem>>, %arg11: memref<128x128xf32, #tpu.memory_space<vmem>>) attributes {dimension_semantics = [], scalar_prefetch = 0 : i64, scratch_operands = 0 : i64, tpu.core_type = #tpu.core_type<tc>} {
    %c0 = arith.constant 0 : index
    %c0_0 = arith.constant 0 : index
    %0 = vector.load %arg0[%c0, %c0_0] : memref<128x128xbf16, #tpu.memory_space<vmem>>, vector<128x128xbf16>
    %c0_1 = arith.constant 0 : index
    %c0_2 = arith.constant 0 : index
    %1 = vector.load %arg1[%c0_1, %c0_2] : memref<128x128xbf16, #tpu.memory_space<vmem>>, vector<128x128xbf16>
    %c0_3 = arith.constant 0 : index
    %c0_4 = arith.constant 0 : index
    %2 = vector.load %arg2[%c0_3, %c0_4] : memref<128x128xbf16, #tpu.memory_space<vmem>>, vector<128x128xbf16>
    %cst = arith.constant dense<0.000000e+00> : vector<128x128xf32>
    %3 = tpu.matmul %1, %2, %cst {dimension_numbers = #tpu.dot_dimension_numbers<[1], [0], [0], [1], [0, 0, 1, 1], [], []>} : vector<128x128xbf16>, vector<128x128xbf16>, vector<128x128xf32> -> vector<128x128xf32>
    %4 = arith.truncf %3 : vector<128x128xf32> to vector<128x128xbf16>
    %cst_5 = arith.constant dense<0.000000e+00> : vector<128x128xf32>
    %5 = tpu.matmul %0, %4, %cst_5 {dimension_numbers = #tpu.dot_dimension_numbers<[1], [0], [0], [1], [0, 0, 1, 1], [], []>} : vector<128x128xbf16>, vector<128x128xbf16>, vector<128x128xf32> -> vector<128x128xf32>
    %c0_6 = arith.constant 0 : index
    %c0_7 = arith.constant 0 : index
    %6 = vector.load %arg3[%c0_6, %c0_7] : memref<1x128xf32, #tpu.memory_space<vmem>>, vector<1x128xf32>
    %7 = vector.broadcast %6 : vector<1x128xf32> to vector<128x128xf32>
    %8 = arith.addf %5, %7 : vector<128x128xf32>
    %9 = math.tanh %8 : vector<128x128xf32>
    %10 = arith.truncf %9 : vector<128x128xf32> to vector<128x128xbf16>
    %c0_8 = arith.constant 0 : index
    %c0_9 = arith.constant 0 : index
    %11 = vector.load %arg4[%c0_8, %c0_9] : memref<128x128xbf16, #tpu.memory_space<vmem>>, vector<128x128xbf16>
    %cst_10 = arith.constant dense<0.000000e+00> : vector<128x128xf32>
    %12 = tpu.matmul %10, %11, %cst_10 {dimension_numbers = #tpu.dot_dimension_numbers<[1], [0], [0], [1], [0, 0, 1, 1], [], []>} : vector<128x128xbf16>, vector<128x128xbf16>, vector<128x128xf32> -> vector<128x128xf32>
    %13 = arith.truncf %12 : vector<128x128xf32> to vector<128x128xbf16>
    %cst_11 = arith.constant dense<0.000000e+00> : vector<128x128xf32>
    %14 = tpu.matmul %0, %13, %cst_11 {dimension_numbers = #tpu.dot_dimension_numbers<[1], [0], [0], [1], [0, 0, 1, 1], [], []>} : vector<128x128xbf16>, vector<128x128xbf16>, vector<128x128xf32> -> vector<128x128xf32>
    %c0_12 = arith.constant 0 : index
    %c0_13 = arith.constant 0 : index
    %15 = vector.load %arg5[%c0_12, %c0_13] : memref<1x128xf32, #tpu.memory_space<vmem>>, vector<1x128xf32>
    %16 = vector.broadcast %15 : vector<1x128xf32> to vector<128x128xf32>
    %17 = arith.addf %14, %16 : vector<128x128xf32>
    %18 = math.tanh %17 : vector<128x128xf32>
    %19 = arith.truncf %18 : vector<128x128xf32> to vector<128x128xbf16>
    %c0_14 = arith.constant 0 : index
    %c0_15 = arith.constant 0 : index
    %20 = vector.load %arg6[%c0_14, %c0_15] : memref<128x128xbf16, #tpu.memory_space<vmem>>, vector<128x128xbf16>
    %cst_16 = arith.constant dense<0.000000e+00> : vector<128x128xf32>
    %21 = tpu.matmul %19, %20, %cst_16 {dimension_numbers = #tpu.dot_dimension_numbers<[1], [0], [0], [1], [0, 0, 1, 1], [], []>} : vector<128x128xbf16>, vector<128x128xbf16>, vector<128x128xf32> -> vector<128x128xf32>
    %22 = arith.truncf %21 : vector<128x128xf32> to vector<128x128xbf16>
    %cst_17 = arith.constant dense<0.000000e+00> : vector<128x128xf32>
    %23 = tpu.matmul %0, %22, %cst_17 {dimension_numbers = #tpu.dot_dimension_numbers<[1], [0], [0], [1], [0, 0, 1, 1], [], []>} : vector<128x128xbf16>, vector<128x128xbf16>, vector<128x128xf32> -> vector<128x128xf32>
    %c0_18 = arith.constant 0 : index
    %c0_19 = arith.constant 0 : index
    %24 = vector.load %arg7[%c0_18, %c0_19] : memref<1x128xf32, #tpu.memory_space<vmem>>, vector<1x128xf32>
    %25 = vector.broadcast %24 : vector<1x128xf32> to vector<128x128xf32>
    %26 = arith.addf %23, %25 : vector<128x128xf32>
    %27 = math.tanh %26 : vector<128x128xf32>
    %c0_20 = arith.constant 0 : index
    %c0_21 = arith.constant 0 : index
    %28 = vector.load %arg10[%c0_20, %c0_21] : memref<128x128xf32, #tpu.memory_space<vmem>>, vector<128x128xf32>
    tpu.vector_store %arg10[%c0_20, %c0_21], %27 {strides = array<i32>} : memref<128x128xf32, #tpu.memory_space<vmem>>, vector<128x128xf32>,
    %29 = arith.truncf %27 : vector<128x128xf32> to vector<128x128xbf16>
    %c0_22 = arith.constant 0 : index
    %c0_23 = arith.constant 0 : index
    %30 = vector.load %arg8[%c0_22, %c0_23] : memref<128x128xbf16, #tpu.memory_space<vmem>>, vector<128x128xbf16>
    %cst_24 = arith.constant dense<0.000000e+00> : vector<128x128xf32>
    %31 = tpu.matmul %29, %30, %cst_24 {dimension_numbers = #tpu.dot_dimension_numbers<[1], [0], [0], [1], [0, 0, 1, 1], [], []>} : vector<128x128xbf16>, vector<128x128xbf16>, vector<128x128xf32> -> vector<128x128xf32>
    %c0_25 = arith.constant 0 : index
    %c0_26 = arith.constant 0 : index
    %32 = vector.load %arg9[%c0_25, %c0_26] : memref<1x128xf32, #tpu.memory_space<vmem>>, vector<1x128xf32>
    %33 = vector.broadcast %32 : vector<1x128xf32> to vector<128x128xf32>
    %34 = arith.addf %31, %33 : vector<128x128xf32>
    %c0_27 = arith.constant 0 : index
    %c0_28 = arith.constant 0 : index
    %35 = vector.load %arg11[%c0_27, %c0_28] : memref<128x128xf32, #tpu.memory_space<vmem>>, vector<128x128xf32>
    tpu.vector_store %arg11[%c0_27, %c0_28], %34 {strides = array<i32>} : memref<128x128xf32, #tpu.memory_space<vmem>>, vector<128x128xf32>,
    return
  }
}

</mosaic_0001>

<llo_original>
// kernel: gcn_forward.1
$region0: #{gcn_forward.1}
  #allocation0 [shape = 'u32[]', space=smem, size = 0x4, offset = 0x4, fixed_abs, tag = 'smem constant byte address 0x4 - core index']
  #allocation1 [shape = 'u32[144,128]{1,0:T(1,128)}', space=vmem, size = 0x12000, scoped, tag = 'internal scratch']
  %s0 = inlined_call_operand.vmem [shape: bf16[128,128], index: 0, kind: input, shape index: {}]
  %s1 = inlined_call_operand.vmem [shape: bf16[128,128], index: 1, kind: input, shape index: {}]
  %s2 = inlined_call_operand.vmem [shape: bf16[128,128], index: 2, kind: input, shape index: {}]
  %s3 = inlined_call_operand.vmem [shape: f32[1,128], index: 3, kind: input, shape index: {}]
  %s4 = inlined_call_operand.vmem [shape: bf16[128,128], index: 4, kind: input, shape index: {}]
  %s5 = inlined_call_operand.vmem [shape: f32[1,128], index: 5, kind: input, shape index: {}]
  %s6 = inlined_call_operand.vmem [shape: bf16[128,128], index: 6, kind: input, shape index: {}]
  %s7 = inlined_call_operand.vmem [shape: f32[1,128], index: 7, kind: input, shape index: {}]
  %s8 = inlined_call_operand.vmem [shape: bf16[128,128], index: 8, kind: input, shape index: {}]
  %s9 = inlined_call_operand.vmem [shape: f32[1,128], index: 9, kind: input, shape index: {}]
  %s10 = inlined_call_operand.vmem [shape: f32[128,128], index: 10, kind: output, shape index: {0}]
  %s11 = inlined_call_operand.vmem [shape: f32[128,128], index: 11, kind: output, shape index: {1}]
  %12 = xla_tuple %s10, %s11
  %s13 = sld [smem:[#allocation0]]
  $region58: #{gcn_forward.1} parent=0
    _
  %s15 = ssub.s32 1, %s13
  %s16 = scalar_select 0, %s15, %s13
  // Predicated region
  $region2: #{gcn_forward.1} parent=0 // pred_check
    _
  $region3: #{gcn_forward.1} parent=0 // pred_check_branch
    %18 = sbr.rel (0) target = $region5
  $region4: #{gcn_forward.1} parent=0 // pred_region
    _
  $region5: #{gcn_forward.1} parent=0 // pred_fallthru
    _
  // Predicated region
  $region6: #{gcn_forward.1} parent=0 // pred_check
    _
  $region7: #{gcn_forward.1} parent=0 // pred_check_branch
    %20 = sbr.rel (0) target = $region9
  $region8: #{gcn_forward.1} parent=0 // pred_region
    _
  $region9: #{gcn_forward.1} parent=0 // pred_fallthru
    _
  // Predicated region
  $region10: #{gcn_forward.1} parent=0 // pred_check
    _
  $region11: #{gcn_forward.1} parent=0 // pred_check_branch
    %22 = sbr.rel (0) target = $region13
  $region12: #{gcn_forward.1} parent=0 // pred_region
    _
  $region13: #{gcn_forward.1} parent=0 // pred_fallthru
    _
  // Predicated region
  $region14: #{gcn_forward.1} parent=0 // pred_check
    _
  $region15: #{gcn_forward.1} parent=0 // pred_check_branch
    %24 = sbr.rel (0) target = $region17
  $region16: #{gcn_forward.1} parent=0 // pred_region
    _
  $region17: #{gcn_forward.1} parent=0 // pred_fallthru
    _
  // Predicated region
  $region18: #{gcn_forward.1} parent=0 // pred_check
    _
  $region19: #{gcn_forward.1} parent=0 // pred_check_branch
    %26 = sbr.rel (0) target = $region21
  $region20: #{gcn_forward.1} parent=0 // pred_region
    _
  $region21: #{gcn_forward.1} parent=0 // pred_fallthru
    _
  // Predicated region
  $region22: #{gcn_forward.1} parent=0 // pred_check
    _
  $region23: #{gcn_forward.1} parent=0 // pred_check_branch
    %28 = sbr.rel (0) target = $region25
  $region24: #{gcn_forward.1} parent=0 // pred_region
    _
  $region25: #{gcn_forward.1} parent=0 // pred_fallthru
    _
  // Predicated region
  $region26: #{gcn_forward.1} parent=0 // pred_check
    _
  $region27: #{gcn_forward.1} parent=0 // pred_check_branch
    %30 = sbr.rel (0) target = $region29
  $region28: #{gcn_forward.1} parent=0 // pred_region
    _
  $region29: #{gcn_forward.1} parent=0 // pred_fallthru
    _
  // Predicated region
  $region30: #{gcn_forward.1} parent=0 // pred_check
    _
  $region31: #{gcn_forward.1} parent=0 // pred_check_branch
    %32 = sbr.rel (0) target = $region33
  $region32: #{gcn_forward.1} parent=0 // pred_region
    _
  $region33: #{gcn_forward.1} parent=0 // pred_fallthru
    _
  // Predicated region
  $region34: #{gcn_forward.1} parent=0 // pred_check
    _
  $region35: #{gcn_forward.1} parent=0 // pred_check_branch
    %34 = sbr.rel (0) target = $region37
  $region36: #{gcn_forward.1} parent=0 // pred_region
    _
  $region37: #{gcn_forward.1} parent=0 // pred_fallthru
    _
  // Predicated region
  $region38: #{gcn_forward.1} parent=0 // pred_check
    _
  $region39: #{gcn_forward.1} parent=0 // pred_check_branch
    %36 = sbr.rel (0) target = $region41
  $region40: #{gcn_forward.1} parent=0 // pred_region
    _
  $region41: #{gcn_forward.1} parent=0 // pred_fallthru
    _
  %v38 = vld [vmem:[%s0] sm:$0xf]
  %v39 = vld [vmem:[%s0 + $0x4] sm:$0xf]
  %v40 = vld [vmem:[%s0 + $0x8] sm:$0xf]
  %v41 = vld [vmem:[%s0 + $0xc] sm:$0xf]
  %v42 = vld [vmem:[%s0 + $0x10] sm:$0xf]
  %v43 = vld [vmem:[%s0 + $0x14] sm:$0xf]
  %v44 = vld [vmem:[%s0 + $0x18] sm:$0xf]
  %v45 = vld [vmem:[%s0 + $0x1c] sm:$0xf]
  %v46 = vld [vmem:[%s0 + $0x20] sm:$0xf]
  %v47 = vld [vmem:[%s0 + $0x24] sm:$0xf]
  %v48 = vld [vmem:[%s0 + $0x28] sm:$0xf]
  %v49 = vld [vmem:[%s0 + $0x2c] sm:$0xf]
  %v50 = vld [vmem:[%s0 + $0x30] sm:$0xf]
  %v51 = vld [vmem:[%s0 + $0x34] sm:$0xf]
  %v52 = vld [vmem:[%s0 + $0x38] sm:$0xf]
  %v53 = vld [vmem:[%s0 + $0x3c] sm:$0xf]
  %v54 = vld [vmem:[%s1] sm:$0xf]
  %v55 = vld [vmem:[%s1 + $0x4] sm:$0xf]
  %v56 = vld [vmem:[%s1 + $0x8] sm:$0xf]
  %v57 = vld [vmem:[%s1 + $0xc] sm:$0xf]
  %v58 = vld [vmem:[%s1 + $0x10] sm:$0xf]
  %v59 = vld [vmem:[%s1 + $0x14] sm:$0xf]
  %v60 = vld [vmem:[%s1 + $0x18] sm:$0xf]
  %v61 = vld [vmem:[%s1 + $0x1c] sm:$0xf]
  %v62 = vld [vmem:[%s1 + $0x20] sm:$0xf]
  %v63 = vld [vmem:[%s1 + $0x24] sm:$0xf]
  %v64 = vld [vmem:[%s1 + $0x28] sm:$0xf]
  %v65 = vld [vmem:[%s1 + $0x2c] sm:$0xf]
  %v66 = vld [vmem:[%s1 + $0x30] sm:$0xf]
  %v67 = vld [vmem:[%s1 + $0x34] sm:$0xf]
  %v68 = vld [vmem:[%s1 + $0x38] sm:$0xf]
  %v69 = vld [vmem:[%s1 + $0x3c] sm:$0xf]
  %v70 = vld [vmem:[%s2] sm:$0xf]
  %v71 = vld [vmem:[%s2 + $0x4] sm:$0xf]
  %v72 = vld [vmem:[%s2 + $0x8] sm:$0xf]
  %v73 = vld [vmem:[%s2 + $0xc] sm:$0xf]
  %v74 = vld [vmem:[%s2 + $0x10] sm:$0xf]
  %v75 = vld [vmem:[%s2 + $0x14] sm:$0xf]
  %v76 = vld [vmem:[%s2 + $0x18] sm:$0xf]
  %v77 = vld [vmem:[%s2 + $0x1c] sm:$0xf]
  %v78 = vld [vmem:[%s2 + $0x20] sm:$0xf]
  %v79 = vld [vmem:[%s2 + $0x24] sm:$0xf]
  %v80 = vld [vmem:[%s2 + $0x28] sm:$0xf]
  %v81 = vld [vmem:[%s2 + $0x2c] sm:$0xf]
  %v82 = vld [vmem:[%s2 + $0x30] sm:$0xf]
  %v83 = vld [vmem:[%s2 + $0x34] sm:$0xf]
  %v84 = vld [vmem:[%s2 + $0x38] sm:$0xf]
  %v85 = vld [vmem:[%s2 + $0x3c] sm:$0xf]
  %v102 = vunpack.c.l.b16 %v54
  %v103 = vunpack.c.l.b16 %v55
  %v104 = vunpack.c.l.b16 %v56
  %v105 = vunpack.c.l.b16 %v57
  %v106 = vunpack.c.l.b16 %v58
  %v107 = vunpack.c.l.b16 %v59
  %v108 = vunpack.c.l.b16 %v60
  %v109 = vunpack.c.l.b16 %v61
  %v110 = vunpack.c.l.b16 %v62
  %v111 = vunpack.c.l.b16 %v63
  %v112 = vunpack.c.l.b16 %v64
  %v113 = vunpack.c.l.b16 %v65
  %v114 = vunpack.c.l.b16 %v66
  %v115 = vunpack.c.l.b16 %v67
  %v116 = vunpack.c.l.b16 %v68
  %v117 = vunpack.c.l.b16 %v69
  %v118 = vpack.c.b16 %v103, %v102
  %v119 = vpack.c.b16 %v105, %v104
  %v120 = vpack.c.b16 %v107, %v106
  %v121 = vpack.c.b16 %v109, %v108
  %v122 = vpack.c.b16 %v111, %v110
  %v123 = vpack.c.b16 %v113, %v112
  %v124 = vpack.c.b16 %v115, %v114
  %v125 = vpack.c.b16 %v117, %v116
  %v150 = vunpack.c.l.b16 %v70
  %v151 = vunpack.c.l.b16 %v71
  %v152 = vunpack.c.l.b16 %v72
  %v153 = vunpack.c.l.b16 %v73
  %v154 = vunpack.c.l.b16 %v74
  %v155 = vunpack.c.l.b16 %v75
  %v156 = vunpack.c.l.b16 %v76
  %v157 = vunpack.c.l.b16 %v77
  %v158 = vunpack.c.l.b16 %v78
  %v159 = vunpack.c.l.b16 %v79
  %v160 = vunpack.c.l.b16 %v80
  %v161 = vunpack.c.l.b16 %v81
  %v162 = vunpack.c.l.b16 %v82
  %v163 = vunpack.c.l.b16 %v83
  %v164 = vunpack.c.l.b16 %v84
  %v165 = vunpack.c.l.b16 %v85
  %v166 = vpack.c.b16 %v151, %v150
  %v167 = vpack.c.b16 %v153, %v152
  %v168 = vpack.c.b16 %v155, %v154
  %v169 = vpack.c.b16 %v157, %v156
  %v170 = vpack.c.b16 %v159, %v158
  %v171 = vpack.c.b16 %v161, %v160
  %v172 = vpack.c.b16 %v163, %v162
  %v173 = vpack.c.b16 %v165, %v164
  %182 = vmatprep.subr.bf16.mxu0 0
  %183 = vmatpush1.bf16.msra.mxu0 %v173
  %184 = vmatprep.subr.bf16.mxu0 0
  %185 = vmatpush1.bf16.msra.mxu0 %v172
  %186 = vmatprep.subr.bf16.mxu0 0
  %187 = vmatpush1.bf16.msra.mxu0 %v171
  %188 = vmatprep.subr.bf16.mxu0 0
  %189 = vmatpush1.bf16.msra.mxu0 %v170
  %190 = vmatprep.subr.bf16.mxu0 0
  %191 = vmatpush1.bf16.msra.mxu0 %v169
  %192 = vmatprep.subr.bf16.mxu0 0
  %193 = vmatpush1.bf16.msra.mxu0 %v168
  %194 = vmatprep.subr.bf16.mxu0 0
  %195 = vmatpush1.bf16.msra.mxu0 %v167
  %196 = vmatprep.subr.bf16.mxu0 0
  %197 = vmatpush1.bf16.msra.mxu0 %v166
  %198 = vmatprep.subr.bf16.mxu0 0
  %199 = vmatpush2.bf16.msra.mxu0 0
  %200 = vmatprep.subr.bf16.mxu0 0
  %201 = vmatpush2.bf16.msra.mxu0 0
  %202 = vmatprep.subr.bf16.mxu0 0
  %203 = vmatpush2.bf16.msra.mxu0 0
  %204 = vmatprep.subr.bf16.mxu0 0
  %205 = vmatpush2.bf16.msra.mxu0 0
  %206 = vmatprep.subr.bf16.mxu0 0
  %207 = vmatpush2.bf16.msra.mxu0 0
  %208 = vmatprep.subr.bf16.mxu0 0
  %209 = vmatpush2.bf16.msra.mxu0 0
  %210 = vmatprep.subr.bf16.mxu0 0
  %211 = vmatpush2.bf16.msra.mxu0 0
  %212 = vmatprep.subr.bf16.mxu0 0
  %213 = vmatpush2.bf16.msra.mxu0 0
  %214 = vmatprep.mubr.bf16.mxu0 0
  %215 = vmatmul.mubr.bf16.gmra.mxu0 %v118
  %v216 = vpop.f32.mrf.mxu0
  %v217 = vadd.f32 0.0, %v216
  %v218 = vpop.f32.mrf.mxu0
  %v219 = vpop.f32.mrf.mxu0
  %v220 = vadd.f32 0.0, %v219
  %v221 = vpop.f32.mrf.mxu0
  %222 = vmatprep.mubr.bf16.mxu0 0
  %223 = vmatmul.mubr.bf16.gmra.mxu0 %v119
  %v224 = vpop.f32.mrf.mxu0
  %v225 = vadd.f32 0.0, %v224
  %v226 = vpop.f32.mrf.mxu0
  %v227 = vpop.f32.mrf.mxu0
  %v228 = vadd.f32 0.0, %v227
  %v229 = vpop.f32.mrf.mxu0
  %230 = vmatprep.mubr.bf16.mxu0 0
  %231 = vmatmul.mubr.bf16.gmra.mxu0 %v120
  %v232 = vpop.f32.mrf.mxu0
  %v233 = vadd.f32 0.0, %v232
  %v234 = vpop.f32.mrf.mxu0
  %v235 = vpop.f32.mrf.mxu0
  %v236 = vadd.f32 0.0, %v235
  %v237 = vpop.f32.mrf.mxu0
  %238 = vmatprep.mubr.bf16.mxu0 0
  %239 = vmatmul.mubr.bf16.gmra.mxu0 %v121
  %v240 = vpop.f32.mrf.mxu0
  %v241 = vadd.f32 0.0, %v240
  %v242 = vpop.f32.mrf.mxu0
  %v243 = vpop.f32.mrf.mxu0
  %v244 = vadd.f32 0.0, %v243
  %v245 = vpop.f32.mrf.mxu0
  %246 = vmatprep.mubr.bf16.mxu0 0
  %247 = vmatmul.mubr.bf16.gmra.mxu0 %v122
  %v248 = vpop.f32.mrf.mxu0
  %v249 = vadd.f32 0.0, %v248
  %v250 = vpop.f32.mrf.mxu0
  %v251 = vpop.f32.mrf.mxu0
  %v252 = vadd.f32 0.0, %v251
  %v253 = vpop.f32.mrf.mxu0
  %254 = vmatprep.mubr.bf16.mxu0 0
  %255 = vmatmul.mubr.bf16.gmra.mxu0 %v123
  %v256 = vpop.f32.mrf.mxu0
  %v257 = vadd.f32 0.0, %v256
  %v258 = vpop.f32.mrf.mxu0
  %v259 = vpop.f32.mrf.mxu0
  %v260 = vadd.f32 0.0, %v259
  %v261 = vpop.f32.mrf.mxu0
  %262 = vmatprep.mubr.bf16.mxu0 0
  %263 = vmatmul.mubr.bf16.gmra.mxu0 %v124
  %v264 = vpop.f32.mrf.mxu0
  %v265 = vadd.f32 0.0, %v264
  %v266 = vpop.f32.mrf.mxu0
  %v267 = vpop.f32.mrf.mxu0
  %v268 = vadd.f32 0.0, %v267
  %v269 = vpop.f32.mrf.mxu0
  %270 = vmatprep.mubr.bf16.mxu0 0
  %271 = vmatmul.mubr.bf16.gmra.mxu0 %v125
  %v272 = vpop.f32.mrf.mxu0
  %v273 = vadd.f32 0.0, %v272
  %v274 = vpop.f32.mrf.mxu0
  %v275 = vpop.f32.mrf.mxu0
  %v276 = vadd.f32 0.0, %v275
  %v277 = vpop.f32.mrf.mxu0
  %278 = vdwg.mxu0
  %v279 = vpack.c.bf16 %v220, %v217
  %v280 = vpack.c.bf16 %v228, %v225
  %v281 = vpack.c.bf16 %v236, %v233
  %v282 = vpack.c.bf16 %v244, %v241
  %v283 = vpack.c.bf16 %v252, %v249
  %v284 = vpack.c.bf16 %v260, %v257
  %v285 = vpack.c.bf16 %v268, %v265
  %v286 = vpack.c.bf16 %v276, %v273
  %v287 = vld [vmem:[%s3] sm:$0x1]
  %v289 = vlaneseq
  %v290 = vshrl.u32 %v289, 7
  %v291 = vsub.s32 0, %v290
  %v292 = vrot.slane %v287, %v291
  %v310 = vunpack.c.l.b16 %v38
  %v311 = vunpack.c.l.b16 %v39
  %v312 = vunpack.c.l.b16 %v40
  %v313 = vunpack.c.l.b16 %v41
  %v314 = vunpack.c.l.b16 %v42
  %v315 = vunpack.c.l.b16 %v43
  %v316 = vunpack.c.l.b16 %v44
  %v317 = vunpack.c.l.b16 %v45
  %v318 = vunpack.c.l.b16 %v46
  %v319 = vunpack.c.l.b16 %v47
  %v320 = vunpack.c.l.b16 %v48
  %v321 = vunpack.c.l.b16 %v49
  %v322 = vunpack.c.l.b16 %v50
  %v323 = vunpack.c.l.b16 %v51
  %v324 = vunpack.c.l.b16 %v52
  %v325 = vunpack.c.l.b16 %v53
  %v326 = vpack.c.b16 %v311, %v310
  %v327 = vpack.c.b16 %v313, %v312
  %v328 = vpack.c.b16 %v315, %v314
  %v329 = vpack.c.b16 %v317, %v316
  %v330 = vpack.c.b16 %v319, %v318
  %v331 = vpack.c.b16 %v321, %v320
  %v332 = vpack.c.b16 %v323, %v322
  %v333 = vpack.c.b16 %v325, %v324
  %342 = vmatprep.subr.bf16.mxu0 0
  %343 = vmatpush1.bf16.msra.mxu0 %v286
  %344 = vmatprep.subr.bf16.mxu0 0
  %345 = vmatpush1.bf16.msra.mxu0 %v285
  %346 = vmatprep.subr.bf16.mxu0 0
  %347 = vmatpush1.bf16.msra.mxu0 %v284
  %348 = vmatprep.subr.bf16.mxu0 0
  %349 = vmatpush1.bf16.msra.mxu0 %v283
  %350 = vmatprep.subr.bf16.mxu0 0
  %351 = vmatpush1.bf16.msra.mxu0 %v282
  %352 = vmatprep.subr.bf16.mxu0 0
  %353 = vmatpush1.bf16.msra.mxu0 %v281
  %354 = vmatprep.subr.bf16.mxu0 0
  %355 = vmatpush1.bf16.msra.mxu0 %v280
  %356 = vmatprep.subr.bf16.mxu0 0
  %357 = vmatpush1.bf16.msra.mxu0 %v279
  %358 = vmatprep.subr.bf16.mxu0 0
  %359 = vmatpush2.bf16.msra.mxu0 0
  %360 = vmatprep.subr.bf16.mxu0 0
  %361 = vmatpush2.bf16.msra.mxu0 0
  %362 = vmatprep.subr.bf16.mxu0 0
  %363 = vmatpush2.bf16.msra.mxu0 0
  %364 = vmatprep.subr.bf16.mxu0 0
  %365 = vmatpush2.bf16.msra.mxu0 0
  %366 = vmatprep.subr.bf16.mxu0 0
  %367 = vmatpush2.bf16.msra.mxu0 0
  %368 = vmatprep.subr.bf16.mxu0 0
  %369 = vmatpush2.bf16.msra.mxu0 0
  %370 = vmatprep.subr.bf16.mxu0 0
  %371 = vmatpush2.bf16.msra.mxu0 0
  %372 = vmatprep.subr.bf16.mxu0 0
  %373 = vmatpush2.bf16.msra.mxu0 0
  %374 = vmatprep.mubr.bf16.mxu0 0
  %375 = vmatmul.mubr.bf16.gmra.mxu0 %v326
  %v376 = vpop.f32.mrf.mxu0
  %v377 = vadd.f32 %v292, %v376
  %v378 = vpop.f32.mrf.mxu0
  %v379 = vpop.f32.mrf.mxu0
  %v380 = vadd.f32 %v292, %v379
  %v381 = vpop.f32.mrf.mxu0
  %382 = vmatprep.mubr.bf16.mxu0 0
  %383 = vmatmul.mubr.bf16.gmra.mxu0 %v327
  %v384 = vpop.f32.mrf.mxu0
  %v385 = vadd.f32 %v292, %v384
  %v386 = vpop.f32.mrf.mxu0
  %v387 = vpop.f32.mrf.mxu0
  %v388 = vadd.f32 %v292, %v387
  %v389 = vpop.f32.mrf.mxu0
  %390 = vmatprep.mubr.bf16.mxu0 0
  %391 = vmatmul.mubr.bf16.gmra.mxu0 %v328
  %v392 = vpop.f32.mrf.mxu0
  %v393 = vadd.f32 %v292, %v392
  %v394 = vpop.f32.mrf.mxu0
  %v395 = vpop.f32.mrf.mxu0
  %v396 = vadd.f32 %v292, %v395
  %v397 = vpop.f32.mrf.mxu0
  %398 = vmatprep.mubr.bf16.mxu0 0
  %399 = vmatmul.mubr.bf16.gmra.mxu0 %v329
  %v400 = vpop.f32.mrf.mxu0
  %v401 = vadd.f32 %v292, %v400
  %v402 = vpop.f32.mrf.mxu0
  %v403 = vpop.f32.mrf.mxu0
  %v404 = vadd.f32 %v292, %v403
  %v405 = vpop.f32.mrf.mxu0
  %406 = vmatprep.mubr.bf16.mxu0 0
  %407 = vmatmul.mubr.bf16.gmra.mxu0 %v330
  %v408 = vpop.f32.mrf.mxu0
  %v409 = vadd.f32 %v292, %v408
  %v410 = vpop.f32.mrf.mxu0
  %v411 = vpop.f32.mrf.mxu0
  %v412 = vadd.f32 %v292, %v411
  %v413 = vpop.f32.mrf.mxu0
  %414 = vmatprep.mubr.bf16.mxu0 0
  %415 = vmatmul.mubr.bf16.gmra.mxu0 %v331
  %v416 = vpop.f32.mrf.mxu0
  %v417 = vadd.f32 %v292, %v416
  %v418 = vpop.f32.mrf.mxu0
  %v419 = vpop.f32.mrf.mxu0
  %v420 = vadd.f32 %v292, %v419
  %v421 = vpop.f32.mrf.mxu0
  %422 = vmatprep.mubr.bf16.mxu0 0
  %423 = vmatmul.mubr.bf16.gmra.mxu0 %v332
  %v424 = vpop.f32.mrf.mxu0
  %v425 = vadd.f32 %v292, %v424
  %v426 = vpop.f32.mrf.mxu0
  %v427 = vpop.f32.mrf.mxu0
  %v428 = vadd.f32 %v292, %v427
  %v429 = vpop.f32.mrf.mxu0
  %430 = vmatprep.mubr.bf16.mxu0 0
  %431 = vmatmul.mubr.bf16.gmra.mxu0 %v333
  %v432 = vpop.f32.mrf.mxu0
  %v433 = vadd.f32 %v292, %v432
  %v434 = vpop.f32.mrf.mxu0
  %v435 = vpop.f32.mrf.mxu0
  %v436 = vadd.f32 %v292, %v435
  %v437 = vpop.f32.mrf.mxu0
  %438 = vdwg.mxu0
  %v439 = vtanh.pop %v377
  %v440 = vtanh.pop %v380
  %v441 = vtanh.pop %v385
  %v442 = vtanh.pop %v388
  %v443 = vtanh.pop %v393
  %v444 = vtanh.pop %v396
  %v445 = vtanh.pop %v401
  %v446 = vtanh.pop %v404
  %v447 = vtanh.pop %v409
  %v448 = vtanh.pop %v412
  %v449 = vtanh.pop %v417
  %v450 = vtanh.pop %v420
  %v451 = vtanh.pop %v425
  %v452 = vtanh.pop %v428
  %v453 = vtanh.pop %v433
  %v454 = vtanh.pop %v436
  %v455 = vpack.c.bf16 %v440, %v439
  %v456 = vpack.c.bf16 %v442, %v441
  %v457 = vpack.c.bf16 %v444, %v443
  %v458 = vpack.c.bf16 %v446, %v445
  %v459 = vpack.c.bf16 %v448, %v447
  %v460 = vpack.c.bf16 %v450, %v449
  %v461 = vpack.c.bf16 %v452, %v451
  %v462 = vpack.c.bf16 %v454, %v453
  %v463 = vld [vmem:[%s4] sm:$0xf]
  %v464 = vld [vmem:[%s4 + $0x4] sm:$0xf]
  %v465 = vld [vmem:[%s4 + $0x8] sm:$0xf]
  %v466 = vld [vmem:[%s4 + $0xc] sm:$0xf]
  %v467 = vld [vmem:[%s4 + $0x10] sm:$0xf]
  %v468 = vld [vmem:[%s4 + $0x14] sm:$0xf]
  %v469 = vld [vmem:[%s4 + $0x18] sm:$0xf]
  %v470 = vld [vmem:[%s4 + $0x1c] sm:$0xf]
  %v471 = vld [vmem:[%s4 + $0x20] sm:$0xf]
  %v472 = vld [vmem:[%s4 + $0x24] sm:$0xf]
  %v473 = vld [vmem:[%s4 + $0x28] sm:$0xf]
  %v474 = vld [vmem:[%s4 + $0x2c] sm:$0xf]
  %v475 = vld [vmem:[%s4 + $0x30] sm:$0xf]
  %v476 = vld [vmem:[%s4 + $0x34] sm:$0xf]
  %v477 = vld [vmem:[%s4 + $0x38] sm:$0xf]
  %v478 = vld [vmem:[%s4 + $0x3c] sm:$0xf]
  %v495 = vunpack.c.l.b16 %v463
  %v496 = vunpack.c.l.b16 %v464
  %v497 = vunpack.c.l.b16 %v465
  %v498 = vunpack.c.l.b16 %v466
  %v499 = vunpack.c.l.b16 %v467
  %v500 = vunpack.c.l.b16 %v468
  %v501 = vunpack.c.l.b16 %v469
  %v502 = vunpack.c.l.b16 %v470
  %v503 = vunpack.c.l.b16 %v471
  %v504 = vunpack.c.l.b16 %v472
  %v505 = vunpack.c.l.b16 %v473
  %v506 = vunpack.c.l.b16 %v474
  %v507 = vunpack.c.l.b16 %v475
  %v508 = vunpack.c.l.b16 %v476
  %v509 = vunpack.c.l.b16 %v477
  %v510 = vunpack.c.l.b16 %v478
  %v511 = vpack.c.b16 %v496, %v495
  %v512 = vpack.c.b16 %v498, %v497
  %v513 = vpack.c.b16 %v500, %v499
  %v514 = vpack.c.b16 %v502, %v501
  %v515 = vpack.c.b16 %v504, %v503
  %v516 = vpack.c.b16 %v506, %v505
  %v517 = vpack.c.b16 %v508, %v507
  %v518 = vpack.c.b16 %v510, %v509
  %527 = vmatprep.subr.bf16.mxu0 0
  %528 = vmatpush1.bf16.msra.mxu0 %v518
  %529 = vmatprep.subr.bf16.mxu0 0
  %530 = vmatpush1.bf16.msra.mxu0 %v517
  %531 = vmatprep.subr.bf16.mxu0 0
  %532 = vmatpush1.bf16.msra.mxu0 %v516
  %533 = vmatprep.subr.bf16.mxu0 0
  %534 = vmatpush1.bf16.msra.mxu0 %v515
  %535 = vmatprep.subr.bf16.mxu0 0
  %536 = vmatpush1.bf16.msra.mxu0 %v514
  %537 = vmatprep.subr.bf16.mxu0 0
  %538 = vmatpush1.bf16.msra.mxu0 %v513
  %539 = vmatprep.subr.bf16.mxu0 0
  %540 = vmatpush1.bf16.msra.mxu0 %v512
  %541 = vmatprep.subr.bf16.mxu0 0
  %542 = vmatpush1.bf16.msra.mxu0 %v511
  %543 = vmatprep.subr.bf16.mxu0 0
  %544 = vmatpush2.bf16.msra.mxu0 0
  %545 = vmatprep.subr.bf16.mxu0 0
  %546 = vmatpush2.bf16.msra.mxu0 0
  %547 = vmatprep.subr.bf16.mxu0 0
  %548 = vmatpush2.bf16.msra.mxu0 0
  %549 = vmatprep.subr.bf16.mxu0 0
  %550 = vmatpush2.bf16.msra.mxu0 0
  %551 = vmatprep.subr.bf16.mxu0 0
  %552 = vmatpush2.bf16.msra.mxu0 0
  %553 = vmatprep.subr.bf16.mxu0 0
  %554 = vmatpush2.bf16.msra.mxu0 0
  %555 = vmatprep.subr.bf16.mxu0 0
  %556 = vmatpush2.bf16.msra.mxu0 0
  %557 = vmatprep.subr.bf16.mxu0 0
  %558 = vmatpush2.bf16.msra.mxu0 0
  %559 = vmatprep.mubr.bf16.mxu0 0
  %560 = vmatmul.mubr.bf16.gmra.mxu0 %v455
  %v561 = vpop.f32.mrf.mxu0
  %v562 = vadd.f32 0.0, %v561
  %v563 = vpop.f32.mrf.mxu0
  %v564 = vpop.f32.mrf.mxu0
  %v565 = vadd.f32 0.0, %v564
  %v566 = vpop.f32.mrf.mxu0
  %567 = vmatprep.mubr.bf16.mxu0 0
  %568 = vmatmul.mubr.bf16.gmra.mxu0 %v456
  %v569 = vpop.f32.mrf.mxu0
  %v570 = vadd.f32 0.0, %v569
  %v571 = vpop.f32.mrf.mxu0
  %v572 = vpop.f32.mrf.mxu0
  %v573 = vadd.f32 0.0, %v572
  %v574 = vpop.f32.mrf.mxu0
  %575 = vmatprep.mubr.bf16.mxu0 0
  %576 = vmatmul.mubr.bf16.gmra.mxu0 %v457
  %v577 = vpop.f32.mrf.mxu0
  %v578 = vadd.f32 0.0, %v577
  %v579 = vpop.f32.mrf.mxu0
  %v580 = vpop.f32.mrf.mxu0
  %v581 = vadd.f32 0.0, %v580
  %v582 = vpop.f32.mrf.mxu0
  %583 = vmatprep.mubr.bf16.mxu0 0
  %584 = vmatmul.mubr.bf16.gmra.mxu0 %v458
  %v585 = vpop.f32.mrf.mxu0
  %v586 = vadd.f32 0.0, %v585
  %v587 = vpop.f32.mrf.mxu0
  %v588 = vpop.f32.mrf.mxu0
  %v589 = vadd.f32 0.0, %v588
  %v590 = vpop.f32.mrf.mxu0
  %591 = vmatprep.mubr.bf16.mxu0 0
  %592 = vmatmul.mubr.bf16.gmra.mxu0 %v459
  %v593 = vpop.f32.mrf.mxu0
  %v594 = vadd.f32 0.0, %v593
  %v595 = vpop.f32.mrf.mxu0
  %v596 = vpop.f32.mrf.mxu0
  %v597 = vadd.f32 0.0, %v596
  %v598 = vpop.f32.mrf.mxu0
  %599 = vmatprep.mubr.bf16.mxu0 0
  %600 = vmatmul.mubr.bf16.gmra.mxu0 %v460
  %v601 = vpop.f32.mrf.mxu0
  %v602 = vadd.f32 0.0, %v601
  %v603 = vpop.f32.mrf.mxu0
  %v604 = vpop.f32.mrf.mxu0
  %v605 = vadd.f32 0.0, %v604
  %v606 = vpop.f32.mrf.mxu0
  %607 = vmatprep.mubr.bf16.mxu0 0
  %608 = vmatmul.mubr.bf16.gmra.mxu0 %v461
  %v609 = vpop.f32.mrf.mxu0
  %v610 = vadd.f32 0.0, %v609
  %v611 = vpop.f32.mrf.mxu0
  %v612 = vpop.f32.mrf.mxu0
  %v613 = vadd.f32 0.0, %v612
  %v614 = vpop.f32.mrf.mxu0
  %615 = vmatprep.mubr.bf16.mxu0 0
  %616 = vmatmul.mubr.bf16.gmra.mxu0 %v462
  %v617 = vpop.f32.mrf.mxu0
  %v618 = vadd.f32 0.0, %v617
  %v619 = vpop.f32.mrf.mxu0
  %v620 = vpop.f32.mrf.mxu0
  %v621 = vadd.f32 0.0, %v620
  %v622 = vpop.f32.mrf.mxu0
  %623 = vdwg.mxu0
  %v624 = vpack.c.bf16 %v565, %v562
  %v625 = vpack.c.bf16 %v573, %v570
  %v626 = vpack.c.bf16 %v581, %v578
  %v627 = vpack.c.bf16 %v589, %v586
  %v628 = vpack.c.bf16 %v597, %v594
  %v629 = vpack.c.bf16 %v605, %v602
  %v630 = vpack.c.bf16 %v613, %v610
  %v631 = vpack.c.bf16 %v621, %v618
  %v632 = vld [vmem:[%s5] sm:$0x1]
  %v634 = vlaneseq
  %v635 = vshrl.u32 %v634, 7
  %v636 = vsub.s32 0, %v635
  %v637 = vrot.slane %v632, %v636
  %639 = vmatprep.subr.bf16.mxu0 0
  %640 = vmatpush1.bf16.msra.mxu0 %v631
  %641 = vmatprep.subr.bf16.mxu0 0
  %642 = vmatpush1.bf16.msra.mxu0 %v630
  %643 = vmatprep.subr.bf16.mxu0 0
  %644 = vmatpush1.bf16.msra.mxu0 %v629
  %645 = vmatprep.subr.bf16.mxu0 0
  %646 = vmatpush1.bf16.msra.mxu0 %v628
  %647 = vmatprep.subr.bf16.mxu0 0
  %648 = vmatpush1.bf16.msra.mxu0 %v627
  %649 = vmatprep.subr.bf16.mxu0 0
  %650 = vmatpush1.bf16.msra.mxu0 %v626
  %651 = vmatprep.subr.bf16.mxu0 0
  %652 = vmatpush1.bf16.msra.mxu0 %v625
  %653 = vmatprep.subr.bf16.mxu0 0
  %654 = vmatpush1.bf16.msra.mxu0 %v624
  %655 = vmatprep.subr.bf16.mxu0 0
  %656 = vmatpush2.bf16.msra.mxu0 0
  %657 = vmatprep.subr.bf16.mxu0 0
  %658 = vmatpush2.bf16.msra.mxu0 0
  %659 = vmatprep.subr.bf16.mxu0 0
  %660 = vmatpush2.bf16.msra.mxu0 0
  %661 = vmatprep.subr.bf16.mxu0 0
  %662 = vmatpush2.bf16.msra.mxu0 0
  %663 = vmatprep.subr.bf16.mxu0 0
  %664 = vmatpush2.bf16.msra.mxu0 0
  %665 = vmatprep.subr.bf16.mxu0 0
  %666 = vmatpush2.bf16.msra.mxu0 0
  %667 = vmatprep.subr.bf16.mxu0 0
  %668 = vmatpush2.bf16.msra.mxu0 0
  %669 = vmatprep.subr.bf16.mxu0 0
  %670 = vmatpush2.bf16.msra.mxu0 0
  %671 = vmatprep.mubr.bf16.mxu0 0
  %672 = vmatmul.mubr.bf16.gmra.mxu0 %v326
  %v673 = vpop.f32.mrf.mxu0
  %v674 = vadd.f32 %v637, %v673
  %v675 = vpop.f32.mrf.mxu0
  %v676 = vpop.f32.mrf.mxu0
  %v677 = vadd.f32 %v637, %v676
  %v678 = vpop.f32.mrf.mxu0
  %679 = vmatprep.mubr.bf16.mxu0 0
  %680 = vmatmul.mubr.bf16.gmra.mxu0 %v327
  %v681 = vpop.f32.mrf.mxu0
  %v682 = vadd.f32 %v637, %v681
  %v683 = vpop.f32.mrf.mxu0
  %v684 = vpop.f32.mrf.mxu0
  %v685 = vadd.f32 %v637, %v684
  %v686 = vpop.f32.mrf.mxu0
  %687 = vmatprep.mubr.bf16.mxu0 0
  %688 = vmatmul.mubr.bf16.gmra.mxu0 %v328
  %v689 = vpop.f32.mrf.mxu0
  %v690 = vadd.f32 %v637, %v689
  %v691 = vpop.f32.mrf.mxu0
  %v692 = vpop.f32.mrf.mxu0
  %v693 = vadd.f32 %v637, %v692
  %v694 = vpop.f32.mrf.mxu0
  %695 = vmatprep.mubr.bf16.mxu0 0
  %696 = vmatmul.mubr.bf16.gmra.mxu0 %v329
  %v697 = vpop.f32.mrf.mxu0
  %v698 = vadd.f32 %v637, %v697
  %v699 = vpop.f32.mrf.mxu0
  %v700 = vpop.f32.mrf.mxu0
  %v701 = vadd.f32 %v637, %v700
  %v702 = vpop.f32.mrf.mxu0
  %703 = vmatprep.mubr.bf16.mxu0 0
  %704 = vmatmul.mubr.bf16.gmra.mxu0 %v330
  %v705 = vpop.f32.mrf.mxu0
  %v706 = vadd.f32 %v637, %v705
  %v707 = vpop.f32.mrf.mxu0
  %v708 = vpop.f32.mrf.mxu0
  %v709 = vadd.f32 %v637, %v708
  %v710 = vpop.f32.mrf.mxu0
  %711 = vmatprep.mubr.bf16.mxu0 0
  %712 = vmatmul.mubr.bf16.gmra.mxu0 %v331
  %v713 = vpop.f32.mrf.mxu0
  %v714 = vadd.f32 %v637, %v713
  %v715 = vpop.f32.mrf.mxu0
  %v716 = vpop.f32.mrf.mxu0
  %v717 = vadd.f32 %v637, %v716
  %v718 = vpop.f32.mrf.mxu0
  %719 = vmatprep.mubr.bf16.mxu0 0
  %720 = vmatmul.mubr.bf16.gmra.mxu0 %v332
  %v721 = vpop.f32.mrf.mxu0
  %v722 = vadd.f32 %v637, %v721
  %v723 = vpop.f32.mrf.mxu0
  %v724 = vpop.f32.mrf.mxu0
  %v725 = vadd.f32 %v637, %v724
  %v726 = vpop.f32.mrf.mxu0
  %727 = vmatprep.mubr.bf16.mxu0 0
  %728 = vmatmul.mubr.bf16.gmra.mxu0 %v333
  %v729 = vpop.f32.mrf.mxu0
  %v730 = vadd.f32 %v637, %v729
  %v731 = vpop.f32.mrf.mxu0
  %v732 = vpop.f32.mrf.mxu0
  %v733 = vadd.f32 %v637, %v732
  %v734 = vpop.f32.mrf.mxu0
  %735 = vdwg.mxu0
  %v736 = vtanh.pop %v674
  %v737 = vtanh.pop %v677
  %v738 = vtanh.pop %v682
  %v739 = vtanh.pop %v685
  %v740 = vtanh.pop %v690
  %v741 = vtanh.pop %v693
  %v742 = vtanh.pop %v698
  %v743 = vtanh.pop %v701
  %v744 = vtanh.pop %v706
  %v745 = vtanh.pop %v709
  %v746 = vtanh.pop %v714
  %v747 = vtanh.pop %v717
  %v748 = vtanh.pop %v722
  %v749 = vtanh.pop %v725
  %v750 = vtanh.pop %v730
  %v751 = vtanh.pop %v733
  %v752 = vpack.c.bf16 %v737, %v736
  %v753 = vpack.c.bf16 %v739, %v738
  %v754 = vpack.c.bf16 %v741, %v740
  %v755 = vpack.c.bf16 %v743, %v742
  %v756 = vpack.c.bf16 %v745, %v744
  %v757 = vpack.c.bf16 %v747, %v746
  %v758 = vpack.c.bf16 %v749, %v748
  %v759 = vpack.c.bf16 %v751, %v750
  %v760 = vld [vmem:[%s6] sm:$0xf]
  %v761 = vld [vmem:[%s6 + $0x4] sm:$0xf]
  %v762 = vld [vmem:[%s6 + $0x8] sm:$0xf]
  %v763 = vld [vmem:[%s6 + $0xc] sm:$0xf]
  %v764 = vld [vmem:[%s6 + $0x10] sm:$0xf]
  %v765 = vld [vmem:[%s6 + $0x14] sm:$0xf]
  %v766 = vld [vmem:[%s6 + $0x18] sm:$0xf]
  %v767 = vld [vmem:[%s6 + $0x1c] sm:$0xf]
  %v768 = vld [vmem:[%s6 + $0x20] sm:$0xf]
  %v769 = vld [vmem:[%s6 + $0x24] sm:$0xf]
  %v770 = vld [vmem:[%s6 + $0x28] sm:$0xf]
  %v771 = vld [vmem:[%s6 + $0x2c] sm:$0xf]
  %v772 = vld [vmem:[%s6 + $0x30] sm:$0xf]
  %v773 = vld [vmem:[%s6 + $0x34] sm:$0xf]
  %v774 = vld [vmem:[%s6 + $0x38] sm:$0xf]
  %v775 = vld [vmem:[%s6 + $0x3c] sm:$0xf]
  %v792 = vunpack.c.l.b16 %v760
  %v793 = vunpack.c.l.b16 %v761
  %v794 = vunpack.c.l.b16 %v762
  %v795 = vunpack.c.l.b16 %v763
  %v796 = vunpack.c.l.b16 %v764
  %v797 = vunpack.c.l.b16 %v765
  %v798 = vunpack.c.l.b16 %v766
  %v799 = vunpack.c.l.b16 %v767
  %v800 = vunpack.c.l.b16 %v768
  %v801 = vunpack.c.l.b16 %v769
  %v802 = vunpack.c.l.b16 %v770
  %v803 = vunpack.c.l.b16 %v771
  %v804 = vunpack.c.l.b16 %v772
  %v805 = vunpack.c.l.b16 %v773
  %v806 = vunpack.c.l.b16 %v774
  %v807 = vunpack.c.l.b16 %v775
  %v808 = vpack.c.b16 %v793, %v792
  %v809 = vpack.c.b16 %v795, %v794
  %v810 = vpack.c.b16 %v797, %v796
  %v811 = vpack.c.b16 %v799, %v798
  %v812 = vpack.c.b16 %v801, %v800
  %v813 = vpack.c.b16 %v803, %v802
  %v814 = vpack.c.b16 %v805, %v804
  %v815 = vpack.c.b16 %v807, %v806
  %824 = vmatprep.subr.bf16.mxu0 0
  %825 = vmatpush1.bf16.msra.mxu0 %v815
  %826 = vmatprep.subr.bf16.mxu0 0
  %827 = vmatpush1.bf16.msra.mxu0 %v814
  %828 = vmatprep.subr.bf16.mxu0 0
  %829 = vmatpush1.bf16.msra.mxu0 %v813
  %830 = vmatprep.subr.bf16.mxu0 0
  %831 = vmatpush1.bf16.msra.mxu0 %v812
  %832 = vmatprep.subr.bf16.mxu0 0
  %833 = vmatpush1.bf16.msra.mxu0 %v811
  %834 = vmatprep.subr.bf16.mxu0 0
  %835 = vmatpush1.bf16.msra.mxu0 %v810
  %836 = vmatprep.subr.bf16.mxu0 0
  %837 = vmatpush1.bf16.msra.mxu0 %v809
  %838 = vmatprep.subr.bf16.mxu0 0
  %839 = vmatpush1.bf16.msra.mxu0 %v808
  %840 = vmatprep.subr.bf16.mxu0 0
  %841 = vmatpush2.bf16.msra.mxu0 0
  %842 = vmatprep.subr.bf16.mxu0 0
  %843 = vmatpush2.bf16.msra.mxu0 0
  %844 = vmatprep.subr.bf16.mxu0 0
  %845 = vmatpush2.bf16.msra.mxu0 0
  %846 = vmatprep.subr.bf16.mxu0 0
  %847 = vmatpush2.bf16.msra.mxu0 0
  %848 = vmatprep.subr.bf16.mxu0 0
  %849 = vmatpush2.bf16.msra.mxu0 0
  %850 = vmatprep.subr.bf16.mxu0 0
  %851 = vmatpush2.bf16.msra.mxu0 0
  %852 = vmatprep.subr.bf16.mxu0 0
  %853 = vmatpush2.bf16.msra.mxu0 0
  %854 = vmatprep.subr.bf16.mxu0 0
  %855 = vmatpush2.bf16.msra.mxu0 0
  %856 = vmatprep.mubr.bf16.mxu0 0
  %857 = vmatmul.mubr.bf16.gmra.mxu0 %v752
  %v858 = vpop.f32.mrf.mxu0
  %v859 = vadd.f32 0.0, %v858
  %v860 = vpop.f32.mrf.mxu0
  %v861 = vpop.f32.mrf.mxu0
  %v862 = vadd.f32 0.0, %v861
  %v863 = vpop.f32.mrf.mxu0
  %864 = vmatprep.mubr.bf16.mxu0 0
  %865 = vmatmul.mubr.bf16.gmra.mxu0 %v753
  %v866 = vpop.f32.mrf.mxu0
  %v867 = vadd.f32 0.0, %v866
  %v868 = vpop.f32.mrf.mxu0
  %v869 = vpop.f32.mrf.mxu0
  %v870 = vadd.f32 0.0, %v869
  %v871 = vpop.f32.mrf.mxu0
  %872 = vmatprep.mubr.bf16.mxu0 0
  %873 = vmatmul.mubr.bf16.gmra.mxu0 %v754
  %v874 = vpop.f32.mrf.mxu0
  %v875 = vadd.f32 0.0, %v874
  %v876 = vpop.f32.mrf.mxu0
  %v877 = vpop.f32.mrf.mxu0
  %v878 = vadd.f32 0.0, %v877
  %v879 = vpop.f32.mrf.mxu0
  %880 = vmatprep.mubr.bf16.mxu0 0
  %881 = vmatmul.mubr.bf16.gmra.mxu0 %v755
  %v882 = vpop.f32.mrf.mxu0
  %v883 = vadd.f32 0.0, %v882
  %v884 = vpop.f32.mrf.mxu0
  %v885 = vpop.f32.mrf.mxu0
  %v886 = vadd.f32 0.0, %v885
  %v887 = vpop.f32.mrf.mxu0
  %888 = vmatprep.mubr.bf16.mxu0 0
  %889 = vmatmul.mubr.bf16.gmra.mxu0 %v756
  %v890 = vpop.f32.mrf.mxu0
  %v891 = vadd.f32 0.0, %v890
  %v892 = vpop.f32.mrf.mxu0
  %v893 = vpop.f32.mrf.mxu0
  %v894 = vadd.f32 0.0, %v893
  %v895 = vpop.f32.mrf.mxu0
  %896 = vmatprep.mubr.bf16.mxu0 0
  %897 = vmatmul.mubr.bf16.gmra.mxu0 %v757
  %v898 = vpop.f32.mrf.mxu0
  %v899 = vadd.f32 0.0, %v898
  %v900 = vpop.f32.mrf.mxu0
  %v901 = vpop.f32.mrf.mxu0
  %v902 = vadd.f32 0.0, %v901
  %v903 = vpop.f32.mrf.mxu0
  %904 = vmatprep.mubr.bf16.mxu0 0
  %905 = vmatmul.mubr.bf16.gmra.mxu0 %v758
  %v906 = vpop.f32.mrf.mxu0
  %v907 = vadd.f32 0.0, %v906
  %v908 = vpop.f32.mrf.mxu0
  %v909 = vpop.f32.mrf.mxu0
  %v910 = vadd.f32 0.0, %v909
  %v911 = vpop.f32.mrf.mxu0
  %912 = vmatprep.mubr.bf16.mxu0 0
  %913 = vmatmul.mubr.bf16.gmra.mxu0 %v759
  %v914 = vpop.f32.mrf.mxu0
  %v915 = vadd.f32 0.0, %v914
  %v916 = vpop.f32.mrf.mxu0
  %v917 = vpop.f32.mrf.mxu0
  %v918 = vadd.f32 0.0, %v917
  %v919 = vpop.f32.mrf.mxu0
  %920 = vdwg.mxu0
  %v921 = vpack.c.bf16 %v862, %v859
  %v922 = vpack.c.bf16 %v870, %v867
  %v923 = vpack.c.bf16 %v878, %v875
  %v924 = vpack.c.bf16 %v886, %v883
  %v925 = vpack.c.bf16 %v894, %v891
  %v926 = vpack.c.bf16 %v902, %v899
  %v927 = vpack.c.bf16 %v910, %v907
  %v928 = vpack.c.bf16 %v918, %v915
  %v929 = vld [vmem:[%s7] sm:$0x1]
  %v931 = vlaneseq
  %v932 = vshrl.u32 %v931, 7
  %v933 = vsub.s32 0, %v932
  %v934 = vrot.slane %v929, %v933
  %936 = vmatprep.subr.bf16.mxu0 0
  %937 = vmatpush1.bf16.msra.mxu0 %v928
  %938 = vmatprep.subr.bf16.mxu0 0
  %939 = vmatpush1.bf16.msra.mxu0 %v927
  %940 = vmatprep.subr.bf16.mxu0 0
  %941 = vmatpush1.bf16.msra.mxu0 %v926
  %942 = vmatprep.subr.bf16.mxu0 0
  %943 = vmatpush1.bf16.msra.mxu0 %v925
  %944 = vmatprep.subr.bf16.mxu0 0
  %945 = vmatpush1.bf16.msra.mxu0 %v924
  %946 = vmatprep.subr.bf16.mxu0 0
  %947 = vmatpush1.bf16.msra.mxu0 %v923
  %948 = vmatprep.subr.bf16.mxu0 0
  %949 = vmatpush1.bf16.msra.mxu0 %v922
  %950 = vmatprep.subr.bf16.mxu0 0
  %951 = vmatpush1.bf16.msra.mxu0 %v921
  %952 = vmatprep.subr.bf16.mxu0 0
  %953 = vmatpush2.bf16.msra.mxu0 0
  %954 = vmatprep.subr.bf16.mxu0 0
  %955 = vmatpush2.bf16.msra.mxu0 0
  %956 = vmatprep.subr.bf16.mxu0 0
  %957 = vmatpush2.bf16.msra.mxu0 0
  %958 = vmatprep.subr.bf16.mxu0 0
  %959 = vmatpush2.bf16.msra.mxu0 0
  %960 = vmatprep.subr.bf16.mxu0 0
  %961 = vmatpush2.bf16.msra.mxu0 0
  %962 = vmatprep.subr.bf16.mxu0 0
  %963 = vmatpush2.bf16.msra.mxu0 0
  %964 = vmatprep.subr.bf16.mxu0 0
  %965 = vmatpush2.bf16.msra.mxu0 0
  %966 = vmatprep.subr.bf16.mxu0 0
  %967 = vmatpush2.bf16.msra.mxu0 0
  %968 = vmatprep.mubr.bf16.mxu0 0
  %969 = vmatmul.mubr.bf16.gmra.mxu0 %v326
  %v970 = vpop.f32.mrf.mxu0
  %v971 = vadd.f32 %v934, %v970
  %v972 = vpop.f32.mrf.mxu0
  %v973 = vpop.f32.mrf.mxu0
  %v974 = vadd.f32 %v934, %v973
  %v975 = vpop.f32.mrf.mxu0
  %976 = vmatprep.mubr.bf16.mxu0 0
  %977 = vmatmul.mubr.bf16.gmra.mxu0 %v327
  %v978 = vpop.f32.mrf.mxu0
  %v979 = vadd.f32 %v934, %v978
  %v980 = vpop.f32.mrf.mxu0
  %v981 = vpop.f32.mrf.mxu0
  %v982 = vadd.f32 %v934, %v981
  %v983 = vpop.f32.mrf.mxu0
  %984 = vmatprep.mubr.bf16.mxu0 0
  %985 = vmatmul.mubr.bf16.gmra.mxu0 %v328
  %v986 = vpop.f32.mrf.mxu0
  %v987 = vadd.f32 %v934, %v986
  %v988 = vpop.f32.mrf.mxu0
  %v989 = vpop.f32.mrf.mxu0
  %v990 = vadd.f32 %v934, %v989
  %v991 = vpop.f32.mrf.mxu0
  %992 = vmatprep.mubr.bf16.mxu0 0
  %993 = vmatmul.mubr.bf16.gmra.mxu0 %v329
  %v994 = vpop.f32.mrf.mxu0
  %v995 = vadd.f32 %v934, %v994
  %v996 = vpop.f32.mrf.mxu0
  %v997 = vpop.f32.mrf.mxu0
  %v998 = vadd.f32 %v934, %v997
  %v999 = vpop.f32.mrf.mxu0
  %1000 = vmatprep.mubr.bf16.mxu0 0
  %1001 = vmatmul.mubr.bf16.gmra.mxu0 %v330
  %v1002 = vpop.f32.mrf.mxu0
  %v1003 = vadd.f32 %v934, %v1002
  %v1004 = vpop.f32.mrf.mxu0
  %v1005 = vpop.f32.mrf.mxu0
  %v1006 = vadd.f32 %v934, %v1005
  %v1007 = vpop.f32.mrf.mxu0
  %1008 = vmatprep.mubr.bf16.mxu0 0
  %1009 = vmatmul.mubr.bf16.gmra.mxu0 %v331
  %v1010 = vpop.f32.mrf.mxu0
  %v1011 = vadd.f32 %v934, %v1010
  %v1012 = vpop.f32.mrf.mxu0
  %v1013 = vpop.f32.mrf.mxu0
  %v1014 = vadd.f32 %v934, %v1013
  %v1015 = vpop.f32.mrf.mxu0
  %1016 = vmatprep.mubr.bf16.mxu0 0
  %1017 = vmatmul.mubr.bf16.gmra.mxu0 %v332
  %v1018 = vpop.f32.mrf.mxu0
  %v1019 = vadd.f32 %v934, %v1018
  %v1020 = vpop.f32.mrf.mxu0
  %v1021 = vpop.f32.mrf.mxu0
  %v1022 = vadd.f32 %v934, %v1021
  %v1023 = vpop.f32.mrf.mxu0
  %1024 = vmatprep.mubr.bf16.mxu0 0
  %1025 = vmatmul.mubr.bf16.gmra.mxu0 %v333
  %v1026 = vpop.f32.mrf.mxu0
  %v1027 = vadd.f32 %v934, %v1026
  %v1028 = vpop.f32.mrf.mxu0
  %v1029 = vpop.f32.mrf.mxu0
  %v1030 = vadd.f32 %v934, %v1029
  %v1031 = vpop.f32.mrf.mxu0
  %1032 = vdwg.mxu0
  %v1033 = vtanh.pop %v971
  %v1034 = vtanh.pop %v974
  %v1035 = vtanh.pop %v979
  %v1036 = vtanh.pop %v982
  %v1037 = vtanh.pop %v987
  %v1038 = vtanh.pop %v990
  %v1039 = vtanh.pop %v995
  %v1040 = vtanh.pop %v998
  %v1041 = vtanh.pop %v1003
  %v1042 = vtanh.pop %v1006
  %v1043 = vtanh.pop %v1011
  %v1044 = vtanh.pop %v1014
  %v1045 = vtanh.pop %v1019
  %v1046 = vtanh.pop %v1022
  %v1047 = vtanh.pop %v1027
  %v1048 = vtanh.pop %v1030
  %1049 = vst [vmem:[%s10] sm:$0xff] %v1033
  %1050 = vst [vmem:[%s10 + $0x8] sm:$0xff] %v1034
  %1051 = vst [vmem:[%s10 + $0x10] sm:$0xff] %v1035
  %1052 = vst [vmem:[%s10 + $0x18] sm:$0xff] %v1036
  %1053 = vst [vmem:[%s10 + $0x20] sm:$0xff] %v1037
  %1054 = vst [vmem:[%s10 + $0x28] sm:$0xff] %v1038
  %1055 = vst [vmem:[%s10 + $0x30] sm:$0xff] %v1039
  %1056 = vst [vmem:[%s10 + $0x38] sm:$0xff] %v1040
  %1057 = vst [vmem:[%s10 + $0x40] sm:$0xff] %v1041
  %1058 = vst [vmem:[%s10 + $0x48] sm:$0xff] %v1042
  %1059 = vst [vmem:[%s10 + $0x50] sm:$0xff] %v1043
  %1060 = vst [vmem:[%s10 + $0x58] sm:$0xff] %v1044
  %1061 = vst [vmem:[%s10 + $0x60] sm:$0xff] %v1045
  %1062 = vst [vmem:[%s10 + $0x68] sm:$0xff] %v1046
  %1063 = vst [vmem:[%s10 + $0x70] sm:$0xff] %v1047
  %1064 = vst [vmem:[%s10 + $0x78] sm:$0xff] %v1048
  %v1065 = vpack.c.bf16 %v1034, %v1033
  %v1066 = vpack.c.bf16 %v1036, %v1035
  %v1067 = vpack.c.bf16 %v1038, %v1037
  %v1068 = vpack.c.bf16 %v1040, %v1039
  %v1069 = vpack.c.bf16 %v1042, %v1041
  %v1070 = vpack.c.bf16 %v1044, %v1043
  %v1071 = vpack.c.bf16 %v1046, %v1045
  %v1072 = vpack.c.bf16 %v1048, %v1047
  %v1073 = vld [vmem:[%s8] sm:$0xf]
  %v1074 = vld [vmem:[%s8 + $0x4] sm:$0xf]
  %v1075 = vld [vmem:[%s8 + $0x8] sm:$0xf]
  %v1076 = vld [vmem:[%s8 + $0xc] sm:$0xf]
  %v1077 = vld [vmem:[%s8 + $0x10] sm:$0xf]
  %v1078 = vld [vmem:[%s8 + $0x14] sm:$0xf]
  %v1079 = vld [vmem:[%s8 + $0x18] sm:$0xf]
  %v1080 = vld [vmem:[%s8 + $0x1c] sm:$0xf]
  %v1081 = vld [vmem:[%s8 + $0x20] sm:$0xf]
  %v1082 = vld [vmem:[%s8 + $0x24] sm:$0xf]
  %v1083 = vld [vmem:[%s8 + $0x28] sm:$0xf]
  %v1084 = vld [vmem:[%s8 + $0x2c] sm:$0xf]
  %v1085 = vld [vmem:[%s8 + $0x30] sm:$0xf]
  %v1086 = vld [vmem:[%s8 + $0x34] sm:$0xf]
  %v1087 = vld [vmem:[%s8 + $0x38] sm:$0xf]
  %v1088 = vld [vmem:[%s8 + $0x3c] sm:$0xf]
  %v1089 = vld [vmem:[%s9] sm:$0x1]
  %v1091 = vlaneseq
  %v1092 = vshrl.u32 %v1091, 7
  %v1093 = vsub.s32 0, %v1092
  %v1094 = vrot.slane %v1089, %v1093
  %v1112 = vunpack.c.l.b16 %v1073
  %v1113 = vunpack.c.l.b16 %v1074
  %v1114 = vunpack.c.l.b16 %v1075
  %v1115 = vunpack.c.l.b16 %v1076
  %v1116 = vunpack.c.l.b16 %v1077
  %v1117 = vunpack.c.l.b16 %v1078
  %v1118 = vunpack.c.l.b16 %v1079
  %v1119 = vunpack.c.l.b16 %v1080
  %v1120 = vunpack.c.l.b16 %v1081
  %v1121 = vunpack.c.l.b16 %v1082
  %v1122 = vunpack.c.l.b16 %v1083
  %v1123 = vunpack.c.l.b16 %v1084
  %v1124 = vunpack.c.l.b16 %v1085
  %v1125 = vunpack.c.l.b16 %v1086
  %v1126 = vunpack.c.l.b16 %v1087
  %v1127 = vunpack.c.l.b16 %v1088
  %v1128 = vpack.c.b16 %v1113, %v1112
  %v1129 = vpack.c.b16 %v1115, %v1114
  %v1130 = vpack.c.b16 %v1117, %v1116
  %v1131 = vpack.c.b16 %v1119, %v1118
  %v1132 = vpack.c.b16 %v1121, %v1120
  %v1133 = vpack.c.b16 %v1123, %v1122
  %v1134 = vpack.c.b16 %v1125, %v1124
  %v1135 = vpack.c.b16 %v1127, %v1126
  %1144 = vmatprep.subr.bf16.mxu0 0
  %1145 = vmatpush1.bf16.msra.mxu0 %v1135
  %1146 = vmatprep.subr.bf16.mxu0 0
  %1147 = vmatpush1.bf16.msra.mxu0 %v1134
  %1148 = vmatprep.subr.bf16.mxu0 0
  %1149 = vmatpush1.bf16.msra.mxu0 %v1133
  %1150 = vmatprep.subr.bf16.mxu0 0
  %1151 = vmatpush1.bf16.msra.mxu0 %v1132
  %1152 = vmatprep.subr.bf16.mxu0 0
  %1153 = vmatpush1.bf16.msra.mxu0 %v1131
  %1154 = vmatprep.subr.bf16.mxu0 0
  %1155 = vmatpush1.bf16.msra.mxu0 %v1130
  %1156 = vmatprep.subr.bf16.mxu0 0
  %1157 = vmatpush1.bf16.msra.mxu0 %v1129
  %1158 = vmatprep.subr.bf16.mxu0 0
  %1159 = vmatpush1.bf16.msra.mxu0 %v1128
  %1160 = vmatprep.subr.bf16.mxu0 0
  %1161 = vmatpush2.bf16.msra.mxu0 0
  %1162 = vmatprep.subr.bf16.mxu0 0
  %1163 = vmatpush2.bf16.msra.mxu0 0
  %1164 = vmatprep.subr.bf16.mxu0 0
  %1165 = vmatpush2.bf16.msra.mxu0 0
  %1166 = vmatprep.subr.bf16.mxu0 0
  %1167 = vmatpush2.bf16.msra.mxu0 0
  %1168 = vmatprep.subr.bf16.mxu0 0
  %1169 = vmatpush2.bf16.msra.mxu0 0
  %1170 = vmatprep.subr.bf16.mxu0 0
  %1171 = vmatpush2.bf16.msra.mxu0 0
  %1172 = vmatprep.subr.bf16.mxu0 0
  %1173 = vmatpush2.bf16.msra.mxu0 0
  %1174 = vmatprep.subr.bf16.mxu0 0
  %1175 = vmatpush2.bf16.msra.mxu0 0
  %1176 = vmatprep.mubr.bf16.mxu0 0
  %1177 = vmatmul.mubr.bf16.gmra.mxu0 %v1065
  %v1178 = vpop.f32.mrf.mxu0
  %v1179 = vadd.f32 %v1094, %v1178
  %v1180 = vpop.f32.mrf.mxu0
  %v1181 = vpop.f32.mrf.mxu0
  %v1182 = vadd.f32 %v1094, %v1181
  %v1183 = vpop.f32.mrf.mxu0
  %1184 = vmatprep.mubr.bf16.mxu0 0
  %1185 = vmatmul.mubr.bf16.gmra.mxu0 %v1066
  %v1186 = vpop.f32.mrf.mxu0
  %v1187 = vadd.f32 %v1094, %v1186
  %v1188 = vpop.f32.mrf.mxu0
  %v1189 = vpop.f32.mrf.mxu0
  %v1190 = vadd.f32 %v1094, %v1189
  %v1191 = vpop.f32.mrf.mxu0
  %1192 = vmatprep.mubr.bf16.mxu0 0
  %1193 = vmatmul.mubr.bf16.gmra.mxu0 %v1067
  %v1194 = vpop.f32.mrf.mxu0
  %v1195 = vadd.f32 %v1094, %v1194
  %v1196 = vpop.f32.mrf.mxu0
  %v1197 = vpop.f32.mrf.mxu0
  %v1198 = vadd.f32 %v1094, %v1197
  %v1199 = vpop.f32.mrf.mxu0
  %1200 = vmatprep.mubr.bf16.mxu0 0
  %1201 = vmatmul.mubr.bf16.gmra.mxu0 %v1068
  %v1202 = vpop.f32.mrf.mxu0
  %v1203 = vadd.f32 %v1094, %v1202
  %v1204 = vpop.f32.mrf.mxu0
  %v1205 = vpop.f32.mrf.mxu0
  %v1206 = vadd.f32 %v1094, %v1205
  %v1207 = vpop.f32.mrf.mxu0
  %1208 = vmatprep.mubr.bf16.mxu0 0
  %1209 = vmatmul.mubr.bf16.gmra.mxu0 %v1069
  %v1210 = vpop.f32.mrf.mxu0
  %v1211 = vadd.f32 %v1094, %v1210
  %v1212 = vpop.f32.mrf.mxu0
  %v1213 = vpop.f32.mrf.mxu0
  %v1214 = vadd.f32 %v1094, %v1213
  %v1215 = vpop.f32.mrf.mxu0
  %1216 = vmatprep.mubr.bf16.mxu0 0
  %1217 = vmatmul.mubr.bf16.gmra.mxu0 %v1070
  %v1218 = vpop.f32.mrf.mxu0
  %v1219 = vadd.f32 %v1094, %v1218
  %v1220 = vpop.f32.mrf.mxu0
  %v1221 = vpop.f32.mrf.mxu0
  %v1222 = vadd.f32 %v1094, %v1221
  %v1223 = vpop.f32.mrf.mxu0
  %1224 = vmatprep.mubr.bf16.mxu0 0
  %1225 = vmatmul.mubr.bf16.gmra.mxu0 %v1071
  %v1226 = vpop.f32.mrf.mxu0
  %v1227 = vadd.f32 %v1094, %v1226
  %v1228 = vpop.f32.mrf.mxu0
  %v1229 = vpop.f32.mrf.mxu0
  %v1230 = vadd.f32 %v1094, %v1229
  %v1231 = vpop.f32.mrf.mxu0
  %1232 = vmatprep.mubr.bf16.mxu0 0
  %1233 = vmatmul.mubr.bf16.gmra.mxu0 %v1072
  %v1234 = vpop.f32.mrf.mxu0
  %v1235 = vadd.f32 %v1094, %v1234
  %v1236 = vpop.f32.mrf.mxu0
  %v1237 = vpop.f32.mrf.mxu0
  %v1238 = vadd.f32 %v1094, %v1237
  %v1239 = vpop.f32.mrf.mxu0
  %1240 = vdwg.mxu0
  %1241 = vst [vmem:[%s11] sm:$0xff] %v1179
  %1242 = vst [vmem:[%s11 + $0x8] sm:$0xff] %v1182
  %1243 = vst [vmem:[%s11 + $0x10] sm:$0xff] %v1187
  %1244 = vst [vmem:[%s11 + $0x18] sm:$0xff] %v1190
  %1245 = vst [vmem:[%s11 + $0x20] sm:$0xff] %v1195
  %1246 = vst [vmem:[%s11 + $0x28] sm:$0xff] %v1198
  %1247 = vst [vmem:[%s11 + $0x30] sm:$0xff] %v1203
  %1248 = vst [vmem:[%s11 + $0x38] sm:$0xff] %v1206
  %1249 = vst [vmem:[%s11 + $0x40] sm:$0xff] %v1211
  %1250 = vst [vmem:[%s11 + $0x48] sm:$0xff] %v1214
  %1251 = vst [vmem:[%s11 + $0x50] sm:$0xff] %v1219
  %1252 = vst [vmem:[%s11 + $0x58] sm:$0xff] %v1222
  %1253 = vst [vmem:[%s11 + $0x60] sm:$0xff] %v1227
  %1254 = vst [vmem:[%s11 + $0x68] sm:$0xff] %v1230
  %1255 = vst [vmem:[%s11 + $0x70] sm:$0xff] %v1235
  %1256 = vst [vmem:[%s11 + $0x78] sm:$0xff] %v1238
  // Predicated region
  $region42: #{gcn_forward.1} parent=0 // pred_check
    _
  $region43: #{gcn_forward.1} parent=0 // pred_check_branch
    %1258 = sbr.rel (0) target = $region45
  $region44: #{gcn_forward.1} parent=0 // pred_region
    _
  $region45: #{gcn_forward.1} parent=0 // pred_fallthru
    _
  // Predicated region
  $region46: #{gcn_forward.1} parent=0 // pred_check
    _
  $region47: #{gcn_forward.1} parent=0 // pred_check_branch
    %1260 = sbr.rel (0) target = $region49
  $region48: #{gcn_forward.1} parent=0 // pred_region
    _
  $region49: #{gcn_forward.1} parent=0 // pred_fallthru
    _
  // Predicated region
  $region50: #{gcn_forward.1} parent=0 // pred_check
    _
  $region51: #{gcn_forward.1} parent=0 // pred_check_branch
    %1262 = sbr.rel (0) target = $region53
  $region52: #{gcn_forward.1} parent=0 // pred_region
    _
  $region53: #{gcn_forward.1} parent=0 // pred_fallthru
    _
  // Predicated region
  $region54: #{gcn_forward.1} parent=0 // pred_check
    _
  $region55: #{gcn_forward.1} parent=0 // pred_check_branch
    %1264 = sbr.rel (0) target = $region57
  $region56: #{gcn_forward.1} parent=0 // pred_region
    _
  $region57: #{gcn_forward.1} parent=0 // pred_fallthru
    _

</llo_original>
